<compile_context>
chip_gen: v6e
topology: v6e:2x2x1
jax: 0.10.0
libtpu: 0.0.40
codegen_flags: <defaults>
</compile_context>

<pallas_src>
import math
import functools

import jax
import jax.numpy as jnp
from jax.experimental import pallas as pl
from jax.experimental.pallas import tpu as pltpu


def _round_up(v, m):
    return (v + m - 1) // m * m


def _mlp_kernel(x_ref, w1_ref, b1_ref, w2_ref, b2_ref, o_ref):
    # Linear 1 on the MXU, f32 accumulation: (TM, E) @ (E, H)
    h = jnp.dot(x_ref[...], w1_ref[...], preferred_element_type=jnp.float32)
    h = h + b1_ref[...]                       # bias broadcast (1,H)->(TM,H), f32
    h = jnp.maximum(h, 0.2 * h)               # LeakyReLU(0.2)
    # TODO(synk): Dropout omitted (inference / eval mode -> identity).
    # Linear 2: cast back to the matmul compute dtype (bf16 or f32) for the MXU.
    out = jnp.dot(h.astype(w2_ref.dtype), w2_ref[...],
                  preferred_element_type=jnp.float32)
    out = out + b2_ref[...]
    o_ref[...] = out.astype(o_ref.dtype)


@functools.partial(jax.jit, static_argnames=("block_m", "compute_dtype"))
def generator_mlp(x, w1, b1, w2, b2, *, block_m=512, compute_dtype=None):
    """Fused MLP forward.

    x : (B, E)   w1: (E, H)  b1: (1, H)   w2: (H, F)  b2: (1, F)
    returns (B, F) in x.dtype.

    compute_dtype: dtype of the matmul operands (e.g. jnp.bfloat16). Bias add,
    LeakyReLU and accumulation are always f32.
    """
    B, E = x.shape
    H = w1.shape[1]
    Fo = w2.shape[1]
    out_dtype = x.dtype
    cdt = compute_dtype if compute_dtype is not None else x.dtype

    # Lane-pad contraction / output feature dims to 128; pad batch to the tile.
    Ep = _round_up(E, 128)
    Hp = _round_up(H, 128)
    Fp = _round_up(Fo, 128)
    tm = _round_up(min(block_m, _round_up(B, 8)), 8)   # batch tile (sublane mult.)
    Bp = _round_up(B, tm)

    xp = jnp.zeros((Bp, Ep), cdt).at[:B, :E].set(x.astype(cdt))
    w1p = jnp.zeros((Ep, Hp), cdt).at[:E, :H].set(w1.astype(cdt))
    b1p = jnp.zeros((1, Hp), jnp.float32).at[:, :H].set(b1.astype(jnp.float32))
    w2p = jnp.zeros((Hp, Fp), cdt).at[:H, :Fo].set(w2.astype(cdt))
    b2p = jnp.zeros((1, Fp), jnp.float32).at[:, :Fo].set(b2.astype(jnp.float32))

    grid = (pl.cdiv(Bp, tm),)
    c_item = jnp.dtype(cdt).itemsize
    o_item = jnp.dtype(out_dtype).itemsize
    cost = pl.CostEstimate(
        flops=2 * Bp * (Ep * Hp + Hp * Fp),
        transcendentals=0,
        bytes_accessed=(Bp * Ep * c_item + Ep * Hp * c_item + Hp * Fp * c_item
                        + 4 * (Hp + Fp) + Bp * Fp * o_item),
    )

    out_padded = pl.pallas_call(
        _mlp_kernel,
        out_shape=jax.ShapeDtypeStruct((Bp, Fp), out_dtype),
        grid=grid,
        in_specs=[
            pl.BlockSpec((tm, Ep), lambda i: (i, 0)),   # batch-tiled activations
            pl.BlockSpec((Ep, Hp), lambda i: (0, 0)),   # resident weights
            pl.BlockSpec((1, Hp), lambda i: (0, 0)),
            pl.BlockSpec((Hp, Fp), lambda i: (0, 0)),
            pl.BlockSpec((1, Fp), lambda i: (0, 0)),
        ],
        out_specs=pl.BlockSpec((tm, Fp), lambda i: (i, 0)),
        compiler_params=pltpu.CompilerParams(
            dimension_semantics=("parallel",)),
        cost_estimate=cost,
    )(xp, w1p, b1p, w2p, b2p)

    return out_padded[:B, :Fo]


def _xavier_uniform(key, fan_in, fan_out, dtype=jnp.float32):
    # torch.nn.init.xavier_uniform_ with gain=1.0; stored as (in, out).
    bound = math.sqrt(6.0 / (fan_in + fan_out))
    return jax.random.uniform(key, (fan_in, fan_out), dtype=dtype,
                              minval=-bound, maxval=bound)


def init_generator_mlp_params(key, embed_dim, hidden_size, feature_dim):
    k1, k2 = jax.random.split(key, 2)
    w1 = _xavier_uniform(k1, embed_dim, hidden_size)
    b1 = jnp.full((1, hidden_size), 0.01, dtype=jnp.float32)   # bias.fill_(0.01)
    w2 = _xavier_uniform(k2, hidden_size, feature_dim)
    b2 = jnp.full((1, feature_dim), 0.01, dtype=jnp.float32)
    return w1, b1, w2, b2


def generator_mlp_ref(x, w1, b1, w2, b2):
    h = x @ w1 + b1
    h = jnp.where(h > 0, h, 0.2 * h)
    return h @ w2 + b2


if __name__ == "__main__":
    batch, embed_dim, hidden_size, feature_dim = 8, 32, 64, 16

    key = jax.random.PRNGKey(0)
    kx, kp = jax.random.split(key)
    x = jax.random.normal(kx, (batch, embed_dim), dtype=jnp.float32)
    w1, b1, w2, b2 = init_generator_mlp_params(kp, embed_dim, hidden_size, feature_dim)
    ref = generator_mlp_ref(x, w1, b1, w2, b2)

    # f32 matmul path: exact-ish vs reference.
    out_f32 = jax.block_until_ready(
        generator_mlp(x, w1, b1, w2, b2, compute_dtype=jnp.float32))
    assert out_f32.shape == (batch, feature_dim)
    assert jnp.allclose(out_f32, ref, atol=1e-5, rtol=1e-5)

    # bf16 matmul operands (f32 accumulation / elementwise): loose tolerance.
    out_bf16 = jax.block_until_ready(
        generator_mlp(x, w1, b1, w2, b2, compute_dtype=jnp.bfloat16))
    assert out_bf16.shape == (batch, feature_dim)
    assert jnp.allclose(out_bf16, ref, atol=5e-2, rtol=5e-2)

    # Multi-tile grid path (B not a multiple of the tile) to exercise
    # pipelining + batch padding/slicing.
    xb = jax.random.normal(kx, (300, embed_dim), dtype=jnp.float32)
    refb = generator_mlp_ref(xb, w1, b1, w2, b2)
    outb = jax.block_until_ready(
        generator_mlp(xb, w1, b1, w2, b2, block_m=128, compute_dtype=jnp.float32))
    assert outb.shape == (300, feature_dim)
    assert jnp.allclose(outb, refb, atol=1e-4, rtol=1e-4)

    print("KERNEL_OK")
</pallas_src>

<mosaic_0001>
module attributes {stable_mosaic.version = 11 : i64} {
  func.func @_mlp_kernel(%arg0: i32, %arg1: memref<8x128xf32, #tpu.memory_space<vmem>>, %arg2: memref<128x128xf32, #tpu.memory_space<vmem>>, %arg3: memref<1x128xf32, #tpu.memory_space<vmem>>, %arg4: memref<128x128xf32, #tpu.memory_space<vmem>>, %arg5: memref<1x128xf32, #tpu.memory_space<vmem>>, %arg6: memref<8x128xf32, #tpu.memory_space<vmem>>) attributes {dimension_semantics = [#tpu.dimension_semantics<parallel>], iteration_bounds = array<i64: 1>, scalar_prefetch = 0 : i64, scratch_operands = 0 : i64, tpu.core_type = #tpu.core_type<tc>, window_params = [{transform_indices = @transform_0, window_bounds = array<i64: 8, 128>}, {pipeline_mode = #tpu.pipeline_mode<synchronous>, transform_indices = @transform_1, window_bounds = array<i64: 128, 128>}, {pipeline_mode = #tpu.pipeline_mode<synchronous>, transform_indices = @transform_2, window_bounds = array<i64: 1, 128>}, {pipeline_mode = #tpu.pipeline_mode<synchronous>, transform_indices = @transform_3, window_bounds = array<i64: 128, 128>}, {pipeline_mode = #tpu.pipeline_mode<synchronous>, transform_indices = @transform_4, window_bounds = array<i64: 1, 128>}, {transform_indices = @transform_5, window_bounds = array<i64: 8, 128>}]} {
    %c0 = arith.constant 0 : index
    %c0_0 = arith.constant 0 : index
    %0 = vector.load %arg1[%c0, %c0_0] : memref<8x128xf32, #tpu.memory_space<vmem>>, vector<8x128xf32>
    %c0_1 = arith.constant 0 : index
    %c0_2 = arith.constant 0 : index
    %1 = vector.load %arg2[%c0_1, %c0_2] : memref<128x128xf32, #tpu.memory_space<vmem>>, vector<128x128xf32>
    %cst = arith.constant dense<0.000000e+00> : vector<8x128xf32>
    %2 = tpu.matmul %0, %1, %cst {dimension_numbers = #tpu.dot_dimension_numbers<[1], [0], [0], [1], [0, 0, 1, 1], [], []>} : vector<8x128xf32>, vector<128x128xf32>, vector<8x128xf32> -> vector<8x128xf32>
    %c0_3 = arith.constant 0 : index
    %c0_4 = arith.constant 0 : index
    %3 = vector.load %arg3[%c0_3, %c0_4] : memref<1x128xf32, #tpu.memory_space<vmem>>, vector<1x128xf32>
    %4 = vector.broadcast %3 : vector<1x128xf32> to vector<8x128xf32>
    %5 = arith.addf %2, %4 : vector<8x128xf32>
    %cst_5 = arith.constant 2.000000e-01 : f32
    %6 = vector.broadcast %cst_5 : f32 to vector<8x128xf32>
    %7 = arith.mulf %6, %5 : vector<8x128xf32>
    %8 = arith.maximumf %5, %7 : vector<8x128xf32>
    %c0_6 = arith.constant 0 : index
    %c0_7 = arith.constant 0 : index
    %9 = vector.load %arg4[%c0_6, %c0_7] : memref<128x128xf32, #tpu.memory_space<vmem>>, vector<128x128xf32>
    %cst_8 = arith.constant dense<0.000000e+00> : vector<8x128xf32>
    %10 = tpu.matmul %8, %9, %cst_8 {dimension_numbers = #tpu.dot_dimension_numbers<[1], [0], [0], [1], [0, 0, 1, 1], [], []>} : vector<8x128xf32>, vector<128x128xf32>, vector<8x128xf32> -> vector<8x128xf32>
    %c0_9 = arith.constant 0 : index
    %c0_10 = arith.constant 0 : index
    %11 = vector.load %arg5[%c0_9, %c0_10] : memref<1x128xf32, #tpu.memory_space<vmem>>, vector<1x128xf32>
    %12 = vector.broadcast %11 : vector<1x128xf32> to vector<8x128xf32>
    %13 = arith.addf %10, %12 : vector<8x128xf32>
    %c0_11 = arith.constant 0 : index
    %c0_12 = arith.constant 0 : index
    %14 = vector.load %arg6[%c0_11, %c0_12] : memref<8x128xf32, #tpu.memory_space<vmem>>, vector<8x128xf32>
    tpu.vector_store %arg6[%c0_11, %c0_12], %13 {strides = array<i32>} : memref<8x128xf32, #tpu.memory_space<vmem>>, vector<8x128xf32>,
    return
  }
  func.func @transform_0(%arg0: i32) -> (i32, i32) {
    %c0_i32 = arith.constant 0 : i32
    %c0_i32_0 = arith.constant 0 : i32
    return %arg0, %c0_i32 : i32, i32
  }
  func.func @transform_1(%arg0: i32) -> (i32, i32) {
    %c0_i32 = arith.constant 0 : i32
    %c0_i32_0 = arith.constant 0 : i32
    %c0_i32_1 = arith.constant 0 : i32
    return %c0_i32, %c0_i32_0 : i32, i32
  }
  func.func @transform_2(%arg0: i32) -> (i32, i32) {
    %c0_i32 = arith.constant 0 : i32
    %c0_i32_0 = arith.constant 0 : i32
    %c0_i32_1 = arith.constant 0 : i32
    return %c0_i32, %c0_i32_0 : i32, i32
  }
  func.func @transform_3(%arg0: i32) -> (i32, i32) {
    %c0_i32 = arith.constant 0 : i32
    %c0_i32_0 = arith.constant 0 : i32
    %c0_i32_1 = arith.constant 0 : i32
    return %c0_i32, %c0_i32_0 : i32, i32
  }
  func.func @transform_4(%arg0: i32) -> (i32, i32) {
    %c0_i32 = arith.constant 0 : i32
    %c0_i32_0 = arith.constant 0 : i32
    %c0_i32_1 = arith.constant 0 : i32
    return %c0_i32, %c0_i32_0 : i32, i32
  }
  func.func @transform_5(%arg0: i32) -> (i32, i32) {
    %c0_i32 = arith.constant 0 : i32
    %c0_i32_0 = arith.constant 0 : i32
    return %arg0, %c0_i32 : i32, i32
  }
}

</mosaic_0001>

<llo_original>
// kernel: generator_mlp.1
$region0: #{generator_mlp.1}
  #allocation0 [shape = 'u32[]', space=smem, size = 0x4, offset = 0x4, fixed_abs, tag = 'smem constant byte address 0x4 - core index']
  #allocation1 [shape = 'u32[144,128]{1,0:T(1,128)}', space=vmem, size = 0x12000, scoped, tag = 'internal scratch']
  %s0 = inlined_call_operand.vmem [shape: f32[8,128], index: 0, kind: input, shape index: {}]
  %s1 = inlined_call_operand.vmem [shape: f32[128,128], index: 1, kind: input, shape index: {}]
  %s2 = inlined_call_operand.vmem [shape: f32[1,128], index: 2, kind: input, shape index: {}]
  %s3 = inlined_call_operand.vmem [shape: f32[128,128], index: 3, kind: input, shape index: {}]
  %s4 = inlined_call_operand.vmem [shape: f32[1,128], index: 4, kind: input, shape index: {}]
  %s5 = inlined_call_operand.hbm [shape: f32[8,128], index: 5, kind: output, shape index: {}]
  %s6 = sld [smem:[#allocation0]]
  $region30: #{generator_mlp.1} parent=0
    _
  %s8 = ssub.s32 1, %s6
  %s9 = scalar_select 0, %s8, %s6
  $region1: #{generator_mlp.1} parent=0
    #allocation2 [shape = 'u8[4096]{0}', space=vmem, size = 0x1000, scoped, tag = 'output window, operand 0, single buffered']
    #allocation3 [shape = 's32[1]{0}', space=sflag, size = 0x4, scoped, tag = 'scoped memory for generator_mlp.1']
    %10 = vsyncpa [#allocation3], 0
    // Predicated region
    $region2: #{generator_mlp.1} parent=1 // pred_check
      _
    $region3: #{generator_mlp.1} parent=1 // pred_check_branch
      %12 = sbr.rel (0) target = $region5
    $region4: #{generator_mlp.1} parent=1 // pred_region
      _
    $region5: #{generator_mlp.1} parent=1 // pred_fallthru
      _
    // Predicated region
    $region6: #{generator_mlp.1} parent=1 // pred_check
      _
    $region7: #{generator_mlp.1} parent=1 // pred_check_branch
      %14 = sbr.rel (0) target = $region9
    $region8: #{generator_mlp.1} parent=1 // pred_region
      _
    $region9: #{generator_mlp.1} parent=1 // pred_fallthru
      _
    // Predicated region
    $region10: #{generator_mlp.1} parent=1 // pred_check
      _
    $region11: #{generator_mlp.1} parent=1 // pred_check_branch
      %16 = sbr.rel (0) target = $region13
    $region12: #{generator_mlp.1} parent=1 // pred_region
      _
    $region13: #{generator_mlp.1} parent=1 // pred_fallthru
      _
    // Predicated region
    $region14: #{generator_mlp.1} parent=1 // pred_check
      _
    $region15: #{generator_mlp.1} parent=1 // pred_check_branch
      %18 = sbr.rel (0) target = $region17
    $region16: #{generator_mlp.1} parent=1 // pred_region
      _
    $region17: #{generator_mlp.1} parent=1 // pred_fallthru
      _
    // Predicated region
    $region18: #{generator_mlp.1} parent=1 // pred_check
      _
    $region19: #{generator_mlp.1} parent=1 // pred_check_branch
      %20 = sbr.rel (0) target = $region21
    $region20: #{generator_mlp.1} parent=1 // pred_region
      _
    $region21: #{generator_mlp.1} parent=1 // pred_fallthru
      _
    %v21 = vld [vmem:[%s0] sm:$0xff]
    %v22 = vld [vmem:[%s1] sm:$0xff]
    %v23 = vld [vmem:[%s1 + $0x8] sm:$0xff]
    %v24 = vld [vmem:[%s1 + $0x10] sm:$0xff]
    %v25 = vld [vmem:[%s1 + $0x18] sm:$0xff]
    %v26 = vld [vmem:[%s1 + $0x20] sm:$0xff]
    %v27 = vld [vmem:[%s1 + $0x28] sm:$0xff]
    %v28 = vld [vmem:[%s1 + $0x30] sm:$0xff]
    %v29 = vld [vmem:[%s1 + $0x38] sm:$0xff]
    %v30 = vld [vmem:[%s1 + $0x40] sm:$0xff]
    %v31 = vld [vmem:[%s1 + $0x48] sm:$0xff]
    %v32 = vld [vmem:[%s1 + $0x50] sm:$0xff]
    %v33 = vld [vmem:[%s1 + $0x58] sm:$0xff]
    %v34 = vld [vmem:[%s1 + $0x60] sm:$0xff]
    %v35 = vld [vmem:[%s1 + $0x68] sm:$0xff]
    %v36 = vld [vmem:[%s1 + $0x70] sm:$0xff]
    %v37 = vld [vmem:[%s1 + $0x78] sm:$0xff]
    %v38 = vld [vmem:[%s2] sm:$0x1]
    %v40 = vlaneseq
    %v41 = vshrl.u32 %v40, 7
    %v42 = vsub.s32 0, %v41
    %v43 = vrot.slane %v38, %v42
    %45 = vmatprep.subr.mxu0 0.0
    %46 = vmatpush1.msra.mxu0 %v37
    %47 = vmatprep.subr.mxu0 0.0
    %48 = vmatpush1.msra.mxu0 %v36
    %49 = vmatprep.subr.mxu0 0.0
    %50 = vmatpush1.msra.mxu0 %v35
    %51 = vmatprep.subr.mxu0 0.0
    %52 = vmatpush1.msra.mxu0 %v34
    %53 = vmatprep.subr.mxu0 0.0
    %54 = vmatpush1.msra.mxu0 %v33
    %55 = vmatprep.subr.mxu0 0.0
    %56 = vmatpush1.msra.mxu0 %v32
    %57 = vmatprep.subr.mxu0 0.0
    %58 = vmatpush1.msra.mxu0 %v31
    %59 = vmatprep.subr.mxu0 0.0
    %60 = vmatpush1.msra.mxu0 %v30
    %61 = vmatprep.subr.mxu0 0.0
    %62 = vmatpush1.msra.mxu0 %v29
    %63 = vmatprep.subr.mxu0 0.0
    %64 = vmatpush1.msra.mxu0 %v28
    %65 = vmatprep.subr.mxu0 0.0
    %66 = vmatpush1.msra.mxu0 %v27
    %67 = vmatprep.subr.mxu0 0.0
    %68 = vmatpush1.msra.mxu0 %v26
    %69 = vmatprep.subr.mxu0 0.0
    %70 = vmatpush1.msra.mxu0 %v25
    %71 = vmatprep.subr.mxu0 0.0
    %72 = vmatpush1.msra.mxu0 %v24
    %73 = vmatprep.subr.mxu0 0.0
    %74 = vmatpush1.msra.mxu0 %v23
    %75 = vmatprep.subr.mxu0 0.0
    %76 = vmatpush1.msra.mxu0 %v22
    %77 = vmatprep.subr.mxu0 0.0
    %78 = vmatpush2.msra.mxu0 0.0
    %79 = vmatprep.subr.mxu0 0.0
    %80 = vmatpush2.msra.mxu0 0.0
    %81 = vmatprep.subr.mxu0 0.0
    %82 = vmatpush2.msra.mxu0 0.0
    %83 = vmatprep.subr.mxu0 0.0
    %84 = vmatpush2.msra.mxu0 0.0
    %85 = vmatprep.subr.mxu0 0.0
    %86 = vmatpush2.msra.mxu0 0.0
    %87 = vmatprep.subr.mxu0 0.0
    %88 = vmatpush2.msra.mxu0 0.0
    %89 = vmatprep.subr.mxu0 0.0
    %90 = vmatpush2.msra.mxu0 0.0
    %91 = vmatprep.subr.mxu0 0.0
    %92 = vmatpush2.msra.mxu0 0.0
    %93 = vmatprep.subr.mxu0 0.0
    %94 = vmatpush2.msra.mxu0 0.0
    %95 = vmatprep.subr.mxu0 0.0
    %96 = vmatpush2.msra.mxu0 0.0
    %97 = vmatprep.subr.mxu0 0.0
    %98 = vmatpush2.msra.mxu0 0.0
    %99 = vmatprep.subr.mxu0 0.0
    %100 = vmatpush2.msra.mxu0 0.0
    %101 = vmatprep.subr.mxu0 0.0
    %102 = vmatpush2.msra.mxu0 0.0
    %103 = vmatprep.subr.mxu0 0.0
    %104 = vmatpush2.msra.mxu0 0.0
    %105 = vmatprep.subr.mxu0 0.0
    %106 = vmatpush2.msra.mxu0 0.0
    %107 = vmatprep.subr.mxu0 0.0
    %108 = vmatpush2.msra.mxu0 0.0
    %109 = vmatprep.mubr.f32.mxu0 0.0
    %110 = vmatmul.mubr.f32.gmra.mxu0 %v21
    %v111 = vpop.f32.mrf.mxu0
    %v112 = vadd.f32 %v43, %v111
    %v113 = vpop.f32.mrf.mxu0
    %114 = vdwg.mxu0
    %v115 = vmul.f32 %v112, 0.2
    %v116 = vmax.f32 %v112, %v115
    %v117 = vld [vmem:[%s3] sm:$0xff]
    %v118 = vld [vmem:[%s3 + $0x8] sm:$0xff]
    %v119 = vld [vmem:[%s3 + $0x10] sm:$0xff]
    %v120 = vld [vmem:[%s3 + $0x18] sm:$0xff]
    %v121 = vld [vmem:[%s3 + $0x20] sm:$0xff]
    %v122 = vld [vmem:[%s3 + $0x28] sm:$0xff]
    %v123 = vld [vmem:[%s3 + $0x30] sm:$0xff]
    %v124 = vld [vmem:[%s3 + $0x38] sm:$0xff]
    %v125 = vld [vmem:[%s3 + $0x40] sm:$0xff]
    %v126 = vld [vmem:[%s3 + $0x48] sm:$0xff]
    %v127 = vld [vmem:[%s3 + $0x50] sm:$0xff]
    %v128 = vld [vmem:[%s3 + $0x58] sm:$0xff]
    %v129 = vld [vmem:[%s3 + $0x60] sm:$0xff]
    %v130 = vld [vmem:[%s3 + $0x68] sm:$0xff]
    %v131 = vld [vmem:[%s3 + $0x70] sm:$0xff]
    %v132 = vld [vmem:[%s3 + $0x78] sm:$0xff]
    %v133 = vld [vmem:[%s4] sm:$0x1]
    %v135 = vlaneseq
    %v136 = vshrl.u32 %v135, 7
    %v137 = vsub.s32 0, %v136
    %v138 = vrot.slane %v133, %v137
    %140 = vmatprep.subr.mxu0 0.0
    %141 = vmatpush1.msra.mxu0 %v132
    %142 = vmatprep.subr.mxu0 0.0
    %143 = vmatpush1.msra.mxu0 %v131
    %144 = vmatprep.subr.mxu0 0.0
    %145 = vmatpush1.msra.mxu0 %v130
    %146 = vmatprep.subr.mxu0 0.0
    %147 = vmatpush1.msra.mxu0 %v129
    %148 = vmatprep.subr.mxu0 0.0
    %149 = vmatpush1.msra.mxu0 %v128
    %150 = vmatprep.subr.mxu0 0.0
    %151 = vmatpush1.msra.mxu0 %v127
    %152 = vmatprep.subr.mxu0 0.0
    %153 = vmatpush1.msra.mxu0 %v126
    %154 = vmatprep.subr.mxu0 0.0
    %155 = vmatpush1.msra.mxu0 %v125
    %156 = vmatprep.subr.mxu0 0.0
    %157 = vmatpush1.msra.mxu0 %v124
    %158 = vmatprep.subr.mxu0 0.0
    %159 = vmatpush1.msra.mxu0 %v123
    %160 = vmatprep.subr.mxu0 0.0
    %161 = vmatpush1.msra.mxu0 %v122
    %162 = vmatprep.subr.mxu0 0.0
    %163 = vmatpush1.msra.mxu0 %v121
    %164 = vmatprep.subr.mxu0 0.0
    %165 = vmatpush1.msra.mxu0 %v120
    %166 = vmatprep.subr.mxu0 0.0
    %167 = vmatpush1.msra.mxu0 %v119
    %168 = vmatprep.subr.mxu0 0.0
    %169 = vmatpush1.msra.mxu0 %v118
    %170 = vmatprep.subr.mxu0 0.0
    %171 = vmatpush1.msra.mxu0 %v117
    %172 = vmatprep.subr.mxu0 0.0
    %173 = vmatpush2.msra.mxu0 0.0
    %174 = vmatprep.subr.mxu0 0.0
    %175 = vmatpush2.msra.mxu0 0.0
    %176 = vmatprep.subr.mxu0 0.0
    %177 = vmatpush2.msra.mxu0 0.0
    %178 = vmatprep.subr.mxu0 0.0
    %179 = vmatpush2.msra.mxu0 0.0
    %180 = vmatprep.subr.mxu0 0.0
    %181 = vmatpush2.msra.mxu0 0.0
    %182 = vmatprep.subr.mxu0 0.0
    %183 = vmatpush2.msra.mxu0 0.0
    %184 = vmatprep.subr.mxu0 0.0
    %185 = vmatpush2.msra.mxu0 0.0
    %186 = vmatprep.subr.mxu0 0.0
    %187 = vmatpush2.msra.mxu0 0.0
    %188 = vmatprep.subr.mxu0 0.0
    %189 = vmatpush2.msra.mxu0 0.0
    %190 = vmatprep.subr.mxu0 0.0
    %191 = vmatpush2.msra.mxu0 0.0
    %192 = vmatprep.subr.mxu0 0.0
    %193 = vmatpush2.msra.mxu0 0.0
    %194 = vmatprep.subr.mxu0 0.0
    %195 = vmatpush2.msra.mxu0 0.0
    %196 = vmatprep.subr.mxu0 0.0
    %197 = vmatpush2.msra.mxu0 0.0
    %198 = vmatprep.subr.mxu0 0.0
    %199 = vmatpush2.msra.mxu0 0.0
    %200 = vmatprep.subr.mxu0 0.0
    %201 = vmatpush2.msra.mxu0 0.0
    %202 = vmatprep.subr.mxu0 0.0
    %203 = vmatpush2.msra.mxu0 0.0
    %204 = vmatprep.mubr.f32.mxu0 0.0
    %205 = vmatmul.mubr.f32.gmra.mxu0 %v116
    %v206 = vpop.f32.mrf.mxu0
    %v207 = vadd.f32 %v138, %v206
    %v208 = vpop.f32.mrf.mxu0
    %209 = vdwg.mxu0
    %210 = vst [vmem:[#allocation2] sm:$0xff] %v207
    // Predicated region
    $region22: #{generator_mlp.1} parent=1 // pred_check
      _
    $region23: #{generator_mlp.1} parent=1 // pred_check_branch
      %212 = sbr.rel (0) target = $region25
    $region24: #{generator_mlp.1} parent=1 // pred_region
      %s214 = ssub.s32 128, 128
      %215 = vsyncadd [#allocation3], %s214
      %s217 = sshll.u32 [#allocation2], 4
      %s218 = int_to_ptr.vmem [resolvable:$true] %s217
      %220 = dma.vmem_to_hbm [thread:$0]  %s218, 128, %s5, [#allocation3]
    $region25: #{generator_mlp.1} parent=1 // pred_fallthru
      _
    // Predicated region
    $region26: #{generator_mlp.1} parent=1 // pred_check
      _
    $region27: #{generator_mlp.1} parent=1 // pred_check_branch
      %222 = sbr.rel (0) target = $region29
    $region28: #{generator_mlp.1} parent=1 // pred_region
      %223 = dma.done [#allocation3], 128
    $region29: #{generator_mlp.1} parent=1 // pred_fallthru
      _
    %224 = vsyncpa [#allocation3], 1

</llo_original>
